<compile_context>
chip_gen: v5e
topology: v5e:2x2
jax: 0.10.0
libtpu: 0.0.40
codegen_flags: <defaults>
</compile_context>

<pallas_src>
import jax
import jax.numpy as jnp
from jax.experimental import pallas as pl
from jax.experimental.pallas import tpu as pltpu


def _outconv_kernel(x_ref, w_ref, b_ref, o_ref):
    # x_ref: (B_BLK, C_in, HW)  VMEM, native dtype (f32 or bf16)
    # w_ref: (C_out, C_in)      SMEM, f32 scalars
    # b_ref: (C_out,)           SMEM, f32 scalars
    # o_ref: (B_BLK, C_out, HW) VMEM
    c_out, c_in = w_ref.shape
    for o in range(c_out):
        # Unrolled VPU MAC over channels; scalar weights broadcast from SMEM.
        # (bf16 slab * f32 scalar) promotes to f32 -> f32 accumulation.
        acc = x_ref[:, 0, :] * w_ref[o, 0] + b_ref[o]
        for c in range(1, c_in):
            acc = acc + x_ref[:, c, :] * w_ref[o, c]
        # Sigmoid on the EUP; cast back to the output dtype on store.
        o_ref[:, o, :] = jax.nn.sigmoid(acc).astype(o_ref.dtype)


def _choose_block_batch(batch, c_in, c_out, hw, itemsize):
    """Images per grid step: ~4 MiB of combined in+out traffic per block."""
    target_bytes = 4 * 1024 * 1024
    per_image = (c_in + c_out) * hw * itemsize
    b_blk = max(1, target_bytes // per_image)
    if batch > 1:
        # Keep at least 2 grid steps so the "parallel" axis can use both v7x TCs.
        b_blk = min(b_blk, -(-batch // 2))
    return int(min(b_blk, batch))


@jax.jit
def out_conv(x, weight, bias):
    """x: (B, C_in, H, W); weight: (C_out, C_in, 1, 1); bias: (C_out,)."""
    B, C_in, H, W = x.shape
    C_out = weight.shape[0]
    HW = H * W

    x2 = x.reshape(B, C_in, HW)                    # free reshape; HW -> lanes
    # Weight / bias are tiny scalar tables: hold them in SMEM as f32 so the
    # per-channel MAC reads f32 scalars (f32 accumulation, no slab upcast).
    w2 = weight.reshape(C_out, C_in).astype(jnp.float32)
    b2 = bias.reshape(C_out).astype(jnp.float32)

    b_blk = _choose_block_batch(B, C_in, C_out, HW, x.dtype.itemsize)
    grid = (pl.cdiv(B, b_blk),)

    cost = pl.CostEstimate(
        flops=2 * B * C_out * C_in * HW,
        transcendentals=B * C_out * HW,
        bytes_accessed=(x.dtype.itemsize * B * C_in * HW
                        + x.dtype.itemsize * B * C_out * HW
                        + 4 * C_out * (C_in + 1)),
    )

    out = pl.pallas_call(
        _outconv_kernel,
        out_shape=jax.ShapeDtypeStruct((B, C_out, HW), x.dtype),
        grid=grid,
        in_specs=[
            pl.BlockSpec((b_blk, C_in, HW), lambda b: (b, 0, 0)),
            pl.BlockSpec(memory_space=pltpu.MemorySpace.SMEM),
            pl.BlockSpec(memory_space=pltpu.MemorySpace.SMEM),
        ],
        out_specs=pl.BlockSpec((b_blk, C_out, HW), lambda b: (b, 0, 0)),
        compiler_params=pltpu.CompilerParams(
            dimension_semantics=("parallel",)),
        cost_estimate=cost,
    )(x2, w2, b2)
    return out.reshape(B, C_out, H, W)


def _reference(x, weight, bias):
    # Pure-JAX reference: 1x1 conv == channel einsum, then sigmoid.
    w2 = weight.reshape(weight.shape[0], weight.shape[1])
    y = jnp.einsum('bchw,oc->bohw', x, w2) + bias.reshape(1, -1, 1, 1)
    return jax.nn.sigmoid(y)


if __name__ == "__main__":
    key = jax.random.PRNGKey(0)
    kx, kw, kb = jax.random.split(key, 3)

    B, C_in, C_out, H, W = 2, 4, 2, 16, 16
    x = jax.random.uniform(kx, (B, C_in, H, W), dtype=jnp.float32)
    weight = jax.random.normal(kw, (C_out, C_in, 1, 1), dtype=jnp.float32) * 0.1
    bias = jax.random.normal(kb, (C_out,), dtype=jnp.float32) * 0.1

    out = jax.block_until_ready(out_conv(x, weight, bias))
    ref = _reference(x, weight, bias)

    assert out.shape == (B, C_out, H, W)
    assert bool(jnp.all(jnp.isfinite(out)))
    assert bool(jnp.allclose(out, ref, atol=1e-5, rtol=1e-5)), "mismatch vs reference"
    print("KERNEL_OK")
</pallas_src>

<mosaic_0001>
module attributes {stable_mosaic.version = 11 : i64} {
  func.func @_outconv_kernel(%arg0: i32, %arg1: memref<1x4x256xf32, #tpu.memory_space<vmem>>, %arg2: memref<2x4xf32, #tpu.memory_space<smem>>, %arg3: memref<2xf32, #tpu.memory_space<smem>>, %arg4: memref<1x2x256xf32, #tpu.memory_space<vmem>>) attributes {dimension_semantics = [#tpu.dimension_semantics<parallel>], iteration_bounds = array<i64: 2>, scalar_prefetch = 0 : i64, scratch_operands = 0 : i64, tpu.core_type = #tpu.core_type<tc>, window_params = [{transform_indices = @transform_0, window_bounds = array<i64: 1, 4, 256>}, {transform_indices = @transform_1, window_bounds = array<i64: 2, 4>}, {transform_indices = @transform_2, window_bounds = array<i64: 2>}, {transform_indices = @transform_3, window_bounds = array<i64: 1, 2, 256>}]} {
    %c0 = arith.constant 0 : index
    %c0_0 = arith.constant 0 : index
    %c0_1 = arith.constant 0 : index
    %0 = vector.load %arg1[%c0, %c0_0, %c0_1] : memref<1x4x256xf32, #tpu.memory_space<vmem>>, vector<1x1x256xf32>
    %1 = vector.shape_cast %0 : vector<1x1x256xf32> to vector<1x256xf32>
    %c0_2 = arith.constant 0 : index
    %c0_3 = arith.constant 0 : index
    %2 = memref.load %arg2[%c0_2, %c0_3] : memref<2x4xf32, #tpu.memory_space<smem>>
    %3 = vector.broadcast %2 : f32 to vector<1x256xf32>
    %4 = arith.mulf %1, %3 : vector<1x256xf32>
    %c0_4 = arith.constant 0 : index
    %5 = memref.load %arg3[%c0_4] : memref<2xf32, #tpu.memory_space<smem>>
    %6 = vector.broadcast %5 : f32 to vector<1x256xf32>
    %7 = arith.addf %4, %6 : vector<1x256xf32>
    %c0_5 = arith.constant 0 : index
    %c1 = arith.constant 1 : index
    %c0_6 = arith.constant 0 : index
    %8 = vector.load %arg1[%c0_5, %c1, %c0_6] : memref<1x4x256xf32, #tpu.memory_space<vmem>>, vector<1x1x256xf32>
    %9 = vector.shape_cast %8 : vector<1x1x256xf32> to vector<1x256xf32>
    %c0_7 = arith.constant 0 : index
    %c1_8 = arith.constant 1 : index
    %10 = memref.load %arg2[%c0_7, %c1_8] : memref<2x4xf32, #tpu.memory_space<smem>>
    %11 = vector.broadcast %10 : f32 to vector<1x256xf32>
    %12 = arith.mulf %9, %11 : vector<1x256xf32>
    %13 = arith.addf %7, %12 : vector<1x256xf32>
    %c0_9 = arith.constant 0 : index
    %c2 = arith.constant 2 : index
    %c0_10 = arith.constant 0 : index
    %14 = vector.load %arg1[%c0_9, %c2, %c0_10] : memref<1x4x256xf32, #tpu.memory_space<vmem>>, vector<1x1x256xf32>
    %15 = vector.shape_cast %14 : vector<1x1x256xf32> to vector<1x256xf32>
    %c0_11 = arith.constant 0 : index
    %c2_12 = arith.constant 2 : index
    %16 = memref.load %arg2[%c0_11, %c2_12] : memref<2x4xf32, #tpu.memory_space<smem>>
    %17 = vector.broadcast %16 : f32 to vector<1x256xf32>
    %18 = arith.mulf %15, %17 : vector<1x256xf32>
    %19 = arith.addf %13, %18 : vector<1x256xf32>
    %c0_13 = arith.constant 0 : index
    %c3 = arith.constant 3 : index
    %c0_14 = arith.constant 0 : index
    %20 = vector.load %arg1[%c0_13, %c3, %c0_14] : memref<1x4x256xf32, #tpu.memory_space<vmem>>, vector<1x1x256xf32>
    %21 = vector.shape_cast %20 : vector<1x1x256xf32> to vector<1x256xf32>
    %c0_15 = arith.constant 0 : index
    %c3_16 = arith.constant 3 : index
    %22 = memref.load %arg2[%c0_15, %c3_16] : memref<2x4xf32, #tpu.memory_space<smem>>
    %23 = vector.broadcast %22 : f32 to vector<1x256xf32>
    %24 = arith.mulf %21, %23 : vector<1x256xf32>
    %25 = arith.addf %19, %24 : vector<1x256xf32>
    %26 = arith.negf %25 : vector<1x256xf32>
    %27 = math.exp %26 : vector<1x256xf32>
    %cst = arith.constant 1.000000e+00 : f32
    %28 = vector.broadcast %cst : f32 to vector<1x256xf32>
    %29 = arith.addf %28, %27 : vector<1x256xf32>
    %30 = arith.divf %28, %29 : vector<1x256xf32>
    %c0_17 = arith.constant 0 : index
    %c0_18 = arith.constant 0 : index
    %c0_19 = arith.constant 0 : index
    %31 = vector.load %arg4[%c0_17, %c0_18, %c0_19] : memref<1x2x256xf32, #tpu.memory_space<vmem>>, vector<1x1x256xf32>
    %32 = vector.shape_cast %31 : vector<1x1x256xf32> to vector<1x256xf32>
    %33 = vector.shape_cast %30 : vector<1x256xf32> to vector<1x1x256xf32>
    tpu.vector_store %arg4[%c0_17, %c0_18, %c0_19], %33 {strides = array<i32>} : memref<1x2x256xf32, #tpu.memory_space<vmem>>, vector<1x1x256xf32>,
    %c0_20 = arith.constant 0 : index
    %c0_21 = arith.constant 0 : index
    %c0_22 = arith.constant 0 : index
    %34 = vector.load %arg1[%c0_20, %c0_21, %c0_22] : memref<1x4x256xf32, #tpu.memory_space<vmem>>, vector<1x1x256xf32>
    %35 = vector.shape_cast %34 : vector<1x1x256xf32> to vector<1x256xf32>
    %c1_23 = arith.constant 1 : index
    %c0_24 = arith.constant 0 : index
    %36 = memref.load %arg2[%c1_23, %c0_24] : memref<2x4xf32, #tpu.memory_space<smem>>
    %37 = vector.broadcast %36 : f32 to vector<1x256xf32>
    %38 = arith.mulf %35, %37 : vector<1x256xf32>
    %c1_25 = arith.constant 1 : index
    %39 = memref.load %arg3[%c1_25] : memref<2xf32, #tpu.memory_space<smem>>
    %40 = vector.broadcast %39 : f32 to vector<1x256xf32>
    %41 = arith.addf %38, %40 : vector<1x256xf32>
    %c0_26 = arith.constant 0 : index
    %c1_27 = arith.constant 1 : index
    %c0_28 = arith.constant 0 : index
    %42 = vector.load %arg1[%c0_26, %c1_27, %c0_28] : memref<1x4x256xf32, #tpu.memory_space<vmem>>, vector<1x1x256xf32>
    %43 = vector.shape_cast %42 : vector<1x1x256xf32> to vector<1x256xf32>
    %c1_29 = arith.constant 1 : index
    %c1_30 = arith.constant 1 : index
    %44 = memref.load %arg2[%c1_29, %c1_30] : memref<2x4xf32, #tpu.memory_space<smem>>
    %45 = vector.broadcast %44 : f32 to vector<1x256xf32>
    %46 = arith.mulf %43, %45 : vector<1x256xf32>
    %47 = arith.addf %41, %46 : vector<1x256xf32>
    %c0_31 = arith.constant 0 : index
    %c2_32 = arith.constant 2 : index
    %c0_33 = arith.constant 0 : index
    %48 = vector.load %arg1[%c0_31, %c2_32, %c0_33] : memref<1x4x256xf32, #tpu.memory_space<vmem>>, vector<1x1x256xf32>
    %49 = vector.shape_cast %48 : vector<1x1x256xf32> to vector<1x256xf32>
    %c1_34 = arith.constant 1 : index
    %c2_35 = arith.constant 2 : index
    %50 = memref.load %arg2[%c1_34, %c2_35] : memref<2x4xf32, #tpu.memory_space<smem>>
    %51 = vector.broadcast %50 : f32 to vector<1x256xf32>
    %52 = arith.mulf %49, %51 : vector<1x256xf32>
    %53 = arith.addf %47, %52 : vector<1x256xf32>
    %c0_36 = arith.constant 0 : index
    %c3_37 = arith.constant 3 : index
    %c0_38 = arith.constant 0 : index
    %54 = vector.load %arg1[%c0_36, %c3_37, %c0_38] : memref<1x4x256xf32, #tpu.memory_space<vmem>>, vector<1x1x256xf32>
    %55 = vector.shape_cast %54 : vector<1x1x256xf32> to vector<1x256xf32>
    %c1_39 = arith.constant 1 : index
    %c3_40 = arith.constant 3 : index
    %56 = memref.load %arg2[%c1_39, %c3_40] : memref<2x4xf32, #tpu.memory_space<smem>>
    %57 = vector.broadcast %56 : f32 to vector<1x256xf32>
    %58 = arith.mulf %55, %57 : vector<1x256xf32>
    %59 = arith.addf %53, %58 : vector<1x256xf32>
    %60 = arith.negf %59 : vector<1x256xf32>
    %61 = math.exp %60 : vector<1x256xf32>
    %cst_41 = arith.constant 1.000000e+00 : f32
    %62 = vector.broadcast %cst_41 : f32 to vector<1x256xf32>
    %63 = arith.addf %62, %61 : vector<1x256xf32>
    %64 = arith.divf %62, %63 : vector<1x256xf32>
    %c0_42 = arith.constant 0 : index
    %c1_43 = arith.constant 1 : index
    %c0_44 = arith.constant 0 : index
    %65 = vector.load %arg4[%c0_42, %c1_43, %c0_44] : memref<1x2x256xf32, #tpu.memory_space<vmem>>, vector<1x1x256xf32>
    %66 = vector.shape_cast %65 : vector<1x1x256xf32> to vector<1x256xf32>
    %67 = vector.shape_cast %64 : vector<1x256xf32> to vector<1x1x256xf32>
    tpu.vector_store %arg4[%c0_42, %c1_43, %c0_44], %67 {strides = array<i32>} : memref<1x2x256xf32, #tpu.memory_space<vmem>>, vector<1x1x256xf32>,
    return
  }
  func.func @transform_0(%arg0: i32) -> (i32, i32, i32) {
    %c0_i32 = arith.constant 0 : i32
    %c0_i32_0 = arith.constant 0 : i32
    %c0_i32_1 = arith.constant 0 : i32
    return %arg0, %c0_i32, %c0_i32_0 : i32, i32, i32
  }
  func.func @transform_1(%arg0: i32) -> (i32, i32) {
    %c0_i32 = arith.constant 0 : i32
    %c0_i32_0 = arith.constant 0 : i32
    %c0_i32_1 = arith.constant 0 : i32
    return %c0_i32, %c0_i32_0 : i32, i32
  }
  func.func @transform_2(%arg0: i32) -> i32 {
    %c0_i32 = arith.constant 0 : i32
    %c0_i32_0 = arith.constant 0 : i32
    return %c0_i32 : i32
  }
  func.func @transform_3(%arg0: i32) -> (i32, i32, i32) {
    %c0_i32 = arith.constant 0 : i32
    %c0_i32_0 = arith.constant 0 : i32
    %c0_i32_1 = arith.constant 0 : i32
    return %arg0, %c0_i32, %c0_i32_0 : i32, i32, i32
  }
}

</mosaic_0001>

<llo_original>
// kernel: out_conv.1
$region0: #{out_conv.1}
  #allocation0 [shape = 'u32[]', space=smem, size = 0x4, offset = 0x4, fixed_abs, tag = 'smem constant byte address 0x4 - core index']
  #allocation1 [shape = 'u32[72,128]{1,0:T(1,128)}', space=vmem, size = 0x9000, scoped, tag = 'internal scratch']
  %s0 = inlined_call_operand.vmem [shape: f32[2,4,256], index: 0, kind: input, shape index: {}]
  %s1 = inlined_call_operand.vmem [shape: f32[2,4], index: 1, kind: input, shape index: {}]
  %s2 = inlined_call_operand.vmem [shape: f32[2], index: 2, kind: input, shape index: {}]
  %s3 = inlined_call_operand.vmem [shape: f32[2,2,256], index: 3, kind: output, shape index: {}]
  %s4 = sld [smem:[#allocation0]]
  $region53: #{out_conv.1} parent=0
    _
  %s6 = ssub.s32 1, %s4
  %s7 = scalar_select 0, %s6, %s4
  $region1: #{out_conv.1} parent=0
    #allocation2 [shape = 'u8[1024]{0}', space=smem, size = 0x400, scoped, tag = 'input window, operand 1, single buffered']
    #allocation3 [shape = 's32[2]{0}', space=sflag, size = 0x8, scoped, tag = 'scoped memory for out_conv.1']
    #allocation4 [shape = 'u8[512]{0}', space=smem, size = 0x200, scoped, tag = 'input window, operand 2, single buffered']
    #allocation5 [shape = 's32[1]{0}', space=sflag, size = 0x4, scoped, tag = 'scoped memory for out_conv.1']
    %8 = vsyncpa [#allocation3], 0
    %9 = vsyncpa [#allocation5], 0
    loop: start=0, step=1, limit=4
    $region2: #{out_conv.1} parent=1 // loop_pre_header
      _
    $region3: #{out_conv.1} parent=1 // loop_header
      %s11 = sphi 0, %s15
      %p12 = scmp.ge.s32.totalorder %s11, 4
      %s21 = sphi 0, %s23
      %s24 = sphi 0, %s21
      %s25 = sphi 0, %s24
      %s41 = sphi 0, %s25
      %s45 = sphi 0, %s45
      %s47 = sphi 0, %s45
      %s48 = sphi 0, %s47
      %s62 = sphi 0, %s48
      %s66 = sphi 0, %s66
      %s68 = sphi 0, %s66
      %s69 = sphi 0, %s68
      %s83 = sphi 0, %s69
      %s89 = sphi 0, %s91
      %s92 = sphi 0, %s89
      %s93 = sphi 0, %s92
      %s109 = sphi 0, %s93
    $region4: #{out_conv.1} parent=1 // loop_header_branch
      %14 = sbr.rel (%p12) target = $region8
    $region5: #{out_conv.1} parent=1 // loop_body
      %s16 = ssub.s32 %s11, 1
      %s17 = ssub.s32 %s11, 2
      %s18 = sadd.s32 %s11, 1
      %s19 = ssub.s32 %s11, %s18
      %p20 = scmp.eq.s32.totalorder %s19, 0
      %s22 = sadd.s32 %s21, 1
      %s23 = scalar_select %p20, %s21, %s22
      %p26 = pneg %p20
      %p27 = scmp.eq.s32.totalorder %s11, 1
      %p28 = por %p26, %p27
      %p29 = scmp.ne.s32.totalorder %s21, %s24
      %p30 = scmp.eq.s32.totalorder %s11, 0
      %p31 = por %p29, %p30
      %p32 = scmp.ne.s32.totalorder %s21, %s24
      %p33 = scmp.eq.s32.totalorder %s16, 1
      %p34 = por %p32, %p33
      %p35 = scmp.ne.s32.totalorder %s24, %s25
      %p36 = scmp.eq.s32.totalorder %s16, 0
      %p37 = por %p35, %p36
      %p38 = scmp.ne.s32.totalorder %s24, %s25
      %p39 = scmp.eq.s32.totalorder %s17, 1
      %p40 = por %p38, %p39
      %p42 = scmp.ne.s32.totalorder %s25, %s41
      %p43 = scmp.eq.s32.totalorder %s17, 0
      %p44 = por %p42, %p43
      %s46 = sadd.s32 %s45, 1
      %p49 = scmp.eq.s32.totalorder %s11, 1
      %p50 = scmp.ne.s32.totalorder %s45, %s47
      %p51 = scmp.eq.s32.totalorder %s11, 0
      %p52 = por %p50, %p51
      %p53 = scmp.ne.s32.totalorder %s45, %s47
      %p54 = scmp.eq.s32.totalorder %s16, 1
      %p55 = por %p53, %p54
      %p56 = scmp.ne.s32.totalorder %s47, %s48
      %p57 = scmp.eq.s32.totalorder %s16, 0
      %p58 = por %p56, %p57
      %p59 = scmp.ne.s32.totalorder %s47, %s48
      %p60 = scmp.eq.s32.totalorder %s17, 1
      %p61 = por %p59, %p60
      %p63 = scmp.ne.s32.totalorder %s48, %s62
      %p64 = scmp.eq.s32.totalorder %s17, 0
      %p65 = por %p63, %p64
      %s67 = sadd.s32 %s66, 1
      %p70 = scmp.eq.s32.totalorder %s11, 1
      %p71 = scmp.ne.s32.totalorder %s66, %s68
      %p72 = scmp.eq.s32.totalorder %s11, 0
      %p73 = por %p71, %p72
      %p74 = scmp.ne.s32.totalorder %s66, %s68
      %p75 = scmp.eq.s32.totalorder %s16, 1
      %p76 = por %p74, %p75
      %p77 = scmp.ne.s32.totalorder %s68, %s69
      %p78 = scmp.eq.s32.totalorder %s16, 0
      %p79 = por %p77, %p78
      %p80 = scmp.ne.s32.totalorder %s68, %s69
      %p81 = scmp.eq.s32.totalorder %s17, 1
      %p82 = por %p80, %p81
      %p84 = scmp.ne.s32.totalorder %s69, %s83
      %p85 = scmp.eq.s32.totalorder %s17, 0
      %p86 = por %p84, %p85
      %s87 = ssub.s32 %s11, %s18
      %p88 = scmp.eq.s32.totalorder %s87, 0
      %s90 = sadd.s32 %s89, 1
      %s91 = scalar_select %p88, %s89, %s90
      %p94 = pneg %p88
      %p95 = scmp.eq.s32.totalorder %s11, 1
      %p96 = por %p94, %p95
      %p97 = scmp.ne.s32.totalorder %s89, %s92
      %p98 = scmp.eq.s32.totalorder %s11, 0
      %p99 = por %p97, %p98
      %p100 = scmp.ne.s32.totalorder %s89, %s92
      %p101 = scmp.eq.s32.totalorder %s16, 1
      %p102 = por %p100, %p101
      %p103 = scmp.ne.s32.totalorder %s92, %s93
      %p104 = scmp.eq.s32.totalorder %s16, 0
      %p105 = por %p103, %p104
      %p106 = scmp.ne.s32.totalorder %s92, %s93
      %p107 = scmp.eq.s32.totalorder %s17, 1
      %p108 = por %p106, %p107
      %p110 = scmp.ne.s32.totalorder %s93, %s109
      %p111 = scmp.eq.s32.totalorder %s17, 0
      %p112 = por %p110, %p111
      %p113 = scmp.le.s32.totalorder 1, %s11
      %p114 = scmp.lt.s32.totalorder %s11, 3
      %p115 = pnand %p113, %p114
      %p116 = pneg %p115
      // Predicated region
      $region9: #{out_conv.1} parent=5 // pred_check
        _
      $region10: #{out_conv.1} parent=5 // pred_check_branch
        %118 = sbr.rel (%p115) target = $region12
      $region11: #{out_conv.1} parent=5 // pred_region
        %s119 = ssub.s32 %s11, 1
        // Predicated region
        $region13: #{out_conv.1} parent=11 // pred_check
          %p120 = pneg %p58
        $region14: #{out_conv.1} parent=11 // pred_check_branch
          %122 = sbr.rel (%p120) target = $region16
        $region15: #{out_conv.1} parent=11 // pred_region
          %124 = vsyncadd [#allocation3], 0
          %s126 = sshll.u32 %s1, 4
          %s127 = int_to_ptr.vmem [resolvable:$true] %s126
          %129 = dma.vmem_to_smem %s127, 32, [#allocation2], [#allocation3]
        $region16: #{out_conv.1} parent=11 // pred_fallthru
          _
        // Predicated region
        $region17: #{out_conv.1} parent=11 // pred_check
          %p130 = pneg %p79
        $region18: #{out_conv.1} parent=11 // pred_check_branch
          %132 = sbr.rel (%p130) target = $region20
        $region19: #{out_conv.1} parent=11 // pred_region
          %134 = vsyncadd [#allocation5], 0
          %s136 = sshll.u32 %s2, 4
          %s137 = int_to_ptr.vmem [resolvable:$true] %s136
          %139 = dma.vmem_to_smem %s137, 16, [#allocation4], [#allocation5]
        $region20: #{out_conv.1} parent=11 // pred_fallthru
          _
      $region12: #{out_conv.1} parent=5 // pred_fallthru
        _
      %p140 = scmp.lt.s32.totalorder %s11, 2
      // Predicated region
      $region21: #{out_conv.1} parent=5 // pred_check
        %p141 = pneg %p140
      $region22: #{out_conv.1} parent=5 // pred_check_branch
        %143 = sbr.rel (%p141) target = $region24
      $region23: #{out_conv.1} parent=5 // pred_region
        // Predicated region
        $region25: #{out_conv.1} parent=23 // pred_check
          %p144 = pneg %p31
        $region26: #{out_conv.1} parent=23 // pred_check_branch
          %146 = sbr.rel (%p144) target = $region28
        $region27: #{out_conv.1} parent=23 // pred_region
          %p147 = scmp.lt.s32.totalorder %s11, 1
          %s148 = scalar_select %p147, %s11, 1
          %s149 = smul.addr %s148, 2
          %s150 = smul.addr %s149, 4
          %s151 = scalar_lea.vmem %s0, %s150
        $region28: #{out_conv.1} parent=23 // pred_fallthru
          _
      $region24: #{out_conv.1} parent=5 // pred_fallthru
        _
      %p152 = scmp.le.s32.totalorder 1, %s11
      %p153 = scmp.lt.s32.totalorder %s11, 3
      %p154 = pnand %p152, %p153
      %p155 = pneg %p154
      // Predicated region
      $region29: #{out_conv.1} parent=5 // pred_check
        _
      $region30: #{out_conv.1} parent=5 // pred_check_branch
        %157 = sbr.rel (%p154) target = $region32
      $region31: #{out_conv.1} parent=5 // pred_region
        %s158 = ssub.s32 %s11, 1
        // Predicated region
        $region33: #{out_conv.1} parent=31 // pred_check
          %p159 = pneg %p58
        $region34: #{out_conv.1} parent=31 // pred_check_branch
          %161 = sbr.rel (%p159) target = $region36
        $region35: #{out_conv.1} parent=31 // pred_region
          %163 = dma.done [#allocation3], 32
        $region36: #{out_conv.1} parent=31 // pred_fallthru
          _
        // Predicated region
        $region37: #{out_conv.1} parent=31 // pred_check
          %p164 = pneg %p79
        $region38: #{out_conv.1} parent=31 // pred_check_branch
          %166 = sbr.rel (%p164) target = $region40
        $region39: #{out_conv.1} parent=31 // pred_region
          %168 = dma.done [#allocation5], 16
        $region40: #{out_conv.1} parent=31 // pred_fallthru
          _
        %169 = sfence
        %p170 = scmp.lt.s32.totalorder %s16, 1
        %s171 = scalar_select %p170, %s16, 1
        %s172 = smul.addr %s171, 2
        %s173 = smul.addr %s172, 4
        %s174 = scalar_lea.vmem %s0, %s173
        %p175 = pneg %p37
        %p176 = pneg %p34
        %p177 = pneg %p58
        %p178 = pneg %p55
        %p179 = pneg %p79
        %p180 = pneg %p76
        %p181 = pneg %p105
        %p182 = pneg %p102
        %p183 = scmp.lt.s32.totalorder %s16, 1
        %s184 = scalar_select %p183, %s16, 1
        %s185 = smul.addr %s184, 2
        %s186 = smul.addr %s185, 2
        %s187 = scalar_lea.vmem %s3, %s186
        %p188 = scmp.lt.s32.totalorder %s16, 1
        %s189 = scalar_select %p188, %s16, 1
        %s190 = smul.addr %s189, 2
        %s191 = smul.addr %s190, 4
        %s192 = scalar_lea.vmem %s0, %s191
        %p193 = scmp.lt.s32.totalorder %s16, 1
        %s194 = scalar_select %p193, %s16, 1
        %s195 = smul.addr %s194, 2
        %s196 = smul.addr %s195, 2
        %s197 = scalar_lea.vmem %s3, %s196
        %v198 = vld [vmem:[%s192] ss:$4 sm:$0x3]
        %s199 = sld [smem:[#allocation2]]
        %v200 = vstv %s199
        %v201 = vmul.f32 %v198, %v200
        %s202 = sld [smem:[#allocation4]]
        %v203 = vstv %s202
        %v204 = vadd.f32 %v201, %v203
        %s205 = scalar_lea.vmem %s192, 1
        %v206 = vld [vmem:[%s205] ss:$4 sm:$0x3]
        %s207 = sld [smem:[#allocation2 + $0x1]]
        %v208 = vstv %s207
        %v209 = vmul.f32 %v206, %v208
        %v210 = vadd.f32 %v204, %v209
        %s211 = scalar_lea.vmem %s192, 2
        %v212 = vld [vmem:[%s211] ss:$4 sm:$0x3]
        %s213 = sld [smem:[#allocation2 + $0x2]]
        %v214 = vstv %s213
        %v215 = vmul.f32 %v212, %v214
        %v216 = vadd.f32 %v210, %v215
        %s217 = scalar_lea.vmem %s192, 3
        %v218 = vld [vmem:[%s217] ss:$4 sm:$0x3]
        %s219 = sld [smem:[#allocation2 + $0x3]]
        %v220 = vstv %s219
        %v221 = vmul.f32 %v218, %v220
        %v222 = vadd.f32 %v216, %v221
        %v223 = vxor.u32 %v222, 2147483648
        %v224 = vmul.f32 %v223, 1.442695
        %v225 = vpow.pop %v224
        %v226 = vadd.f32 %v225, 1.0
        %v227 = vrcp.pop %v226
        %v228 = vmul.f32 %v226, %v227
        %v229 = vsub.f32 1.0, %v228
        %v230 = vmul.f32 %v227, %v229
        %v231 = vadd.f32 %v227, %v230
        %vm232 = vweird.f32 %v226
        %vm233 = vweird.f32 %v227
        %vm234 = vmor %vm232, %vm233
        %v235 = vsel %vm234, %v227, %v231
        %v236 = vand.u32 2147483647, %v226
        %vm237 = vcmp.eq.f32.partialorder %v236, 8.507059e+37
        %v238 = vand.u32 %v226, 2147483648
        %v239 = vor.u32 1.1754944e-38, %v238
        %v240 = vsel %vm237, %v239, %v235
        %v241 = vmul.f32 1.0, %v240
        %v242 = vlaneseq
        %vm243 = vcmp.ge.s32.totalorder %v242, 0
        %vm244 = vcmp.lt.s32.totalorder %v242, 256
        %vm245 = vmand %vm243, %vm244
        %246 = vst.msk [vmem:[%s197] ss:$2 sm:$0x3] %vm245, %v241
        %v247 = vld [vmem:[%s192] ss:$4 sm:$0x3]
        %s248 = sld [smem:[#allocation2 + $0x80]]
        %v249 = vstv %s248
        %v250 = vmul.f32 %v247, %v249
        %s251 = sld [smem:[#allocation4 + $0x1]]
        %v252 = vstv %s251
        %v253 = vadd.f32 %v250, %v252
        %v254 = vld [vmem:[%s205] ss:$4 sm:$0x3]
        %s255 = sld [smem:[#allocation2 + $0x81]]
        %v256 = vstv %s255
        %v257 = vmul.f32 %v254, %v256
        %v258 = vadd.f32 %v253, %v257
        %v259 = vld [vmem:[%s211] ss:$4 sm:$0x3]
        %s260 = sld [smem:[#allocation2 + $0x82]]
        %v261 = vstv %s260
        %v262 = vmul.f32 %v259, %v261
        %v263 = vadd.f32 %v258, %v262
        %v264 = vld [vmem:[%s217] ss:$4 sm:$0x3]
        %s265 = sld [smem:[#allocation2 + $0x83]]
        %v266 = vstv %s265
        %v267 = vmul.f32 %v264, %v266
        %v268 = vadd.f32 %v263, %v267
        %v269 = vxor.u32 %v268, 2147483648
        %v270 = vmul.f32 %v269, 1.442695
        %v271 = vpow.pop %v270
        %v272 = vadd.f32 %v271, 1.0
        %v273 = vrcp.pop %v272
        %v274 = vmul.f32 %v272, %v273
        %v275 = vsub.f32 1.0, %v274
        %v276 = vmul.f32 %v273, %v275
        %v277 = vadd.f32 %v273, %v276
        %vm278 = vweird.f32 %v272
        %vm279 = vweird.f32 %v273
        %vm280 = vmor %vm278, %vm279
        %v281 = vsel %vm280, %v273, %v277
        %v282 = vand.u32 2147483647, %v272
        %vm283 = vcmp.eq.f32.partialorder %v282, 8.507059e+37
        %v284 = vand.u32 %v272, 2147483648
        %v285 = vor.u32 1.1754944e-38, %v284
        %v286 = vsel %vm283, %v285, %v281
        %v287 = vmul.f32 1.0, %v286
        %s288 = scalar_lea.vmem %s197, 1
        %289 = vst.msk [vmem:[%s288] ss:$2 sm:$0x3] %vm245, %v287
        %p290 = scmp.lt.s32.totalorder %s16, 1
        %s291 = scalar_select %p290, %s16, 1
        %s292 = smul.addr %s291, 2
        %s293 = smul.addr %s292, 2
        %s294 = scalar_lea.vmem %s3, %s293
        // Predicated region
        $region41: #{out_conv.1} parent=31 // pred_check
          %p295 = pneg %p102
        $region42: #{out_conv.1} parent=31 // pred_check_branch
          %297 = sbr.rel (%p295) target = $region44
        $region43: #{out_conv.1} parent=31 // pred_region
          _
        $region44: #{out_conv.1} parent=31 // pred_fallthru
          _
      $region32: #{out_conv.1} parent=5 // pred_fallthru
        _
      %p298 = scmp.le.s32.totalorder 2, %s11
      // Predicated region
      $region45: #{out_conv.1} parent=5 // pred_check
        %p299 = pneg %p298
      $region46: #{out_conv.1} parent=5 // pred_check_branch
        %301 = sbr.rel (%p299) target = $region48
      $region47: #{out_conv.1} parent=5 // pred_region
        %s302 = ssub.s32 %s11, 2
        // Predicated region
        $region49: #{out_conv.1} parent=47 // pred_check
          %p303 = pneg %p108
        $region50: #{out_conv.1} parent=47 // pred_check_branch
          %305 = sbr.rel (%p303) target = $region52
        $region51: #{out_conv.1} parent=47 // pred_region
          %p306 = scmp.lt.s32.totalorder %s17, 1
          %s307 = scalar_select %p306, %s17, 1
          %s308 = smul.addr %s307, 2
          %s309 = smul.addr %s308, 2
          %s310 = scalar_lea.vmem %s3, %s309
        $region52: #{out_conv.1} parent=47 // pred_fallthru
          _
      $region48: #{out_conv.1} parent=5 // pred_fallthru
        _
    $region6: #{out_conv.1} parent=1 // loop_footer
      %s15 = sadd.s32 1, %s11
    $region7: #{out_conv.1} parent=1 // loop_footer_branch
      %10 = sbr.rel target = $region3
    $region8: #{out_conv.1} parent=1 // loop_exit
      _
    %311 = vsyncpa [#allocation3], 1
    %s312 = scalar_lea.sflag [#allocation3], 1
    %313 = vsyncpa %s312, 1
    %314 = vsyncpa [#allocation5], 1

</llo_original>
